<compile_context>
chip_gen: v6e
topology: v6e:2x2x1
jax: 0.10.0
libtpu: 0.0.40
codegen_flags: <defaults>
</compile_context>

<pallas_src>
import jax
import jax.numpy as jnp
from jax.experimental import pallas as pl
from jax.experimental.pallas import tpu as pltpu


def rbfnet_kernel(x_ref, dir_ref, bias_ref, o_ref):
    # x_ref:    (TB, F)  streamed input block
    # dir_ref:  (1, C)   per-centroid directions (+/- 1), resident every step
    # bias_ref: (1, C)   precomputed -direction * offset**2, resident
    # o_ref:    (TB, 1)  output block
    x = x_ref[...]                                            # (TB, F)
    sumsq = jnp.sum(x * x, axis=1, keepdims=True)             # (TB, 1)
    nrm = jnp.sqrt(sumsq)                                     # (TB, 1) == torch.norm(p=2, dim=1, keepdim=True)
    vals = dir_ref[...] * nrm + bias_ref[...]                 # (TB, C) == direction*(nrm - offset**2)
    o_ref[...] = jnp.min(vals, axis=1, keepdims=True)         # (TB, 1) min over centroids


def _choose_batch_tile(B, F, *, max_tile=1024, vmem_budget_bytes=8 * 1024 * 1024):
    """Largest multiple-of-8 batch tile whose double-buffered x block fits the budget."""
    bytes_per_row = F * 4  # float32
    tb = (vmem_budget_bytes // (2 * bytes_per_row)) // 8 * 8
    tb = max(8, min(int(tb), max_tile))
    b_pad8 = ((B + 7) // 8) * 8
    return min(tb, b_pad8)


def rbfnet_forward(x, offsets, directions, *, max_tile=1024):
    """x: (B, F) float32; offsets, directions: (C,).  Returns (B, 1)."""
    B, F = x.shape
    C = offsets.shape[0]
    dtype = x.dtype

    # Hoisted parameter math: direction*(nrm - off^2) == direction*nrm + bias.
    dir2 = directions.reshape(1, C).astype(dtype)
    bias2 = (-directions * jnp.square(offsets)).reshape(1, C).astype(dtype)

    tb = _choose_batch_tile(B, F, max_tile=max_tile)
    n_tiles = pl.cdiv(B, tb)
    b_pad = n_tiles * tb
    if b_pad != B:
        x = jnp.pad(x, ((0, b_pad - B), (0, 0)))  # zero rows, sliced away below

    out = pl.pallas_call(
        rbfnet_kernel,
        out_shape=jax.ShapeDtypeStruct((b_pad, 1), dtype),
        grid=(n_tiles,),
        in_specs=[
            pl.BlockSpec((tb, F), lambda i: (i, 0)),   # stream x over the batch
            pl.BlockSpec((1, C), lambda i: (0, 0)),    # directions, resident
            pl.BlockSpec((1, C), lambda i: (0, 0)),    # fused bias, resident
        ],
        out_specs=pl.BlockSpec((tb, 1), lambda i: (i, 0)),
        compiler_params=pltpu.CompilerParams(
            dimension_semantics=("parallel",),         # megacore sharding on v7x
        ),
    )(x, dir2, bias2)
    return out[:B]


def rbfnet_reference(x, offsets, directions):
    """Pure-JAX reference matching the PyTorch module."""
    nrm = jnp.sqrt(jnp.sum(x * x, axis=1, keepdims=True))                         # (B, 1)
    D = directions[:, None, None] * (nrm[None] - jnp.square(offsets)[:, None, None])  # (C, B, 1)
    return jnp.min(D, axis=0)                                                     # (B, 1)


if __name__ == "__main__":
    key = jax.random.PRNGKey(0)
    k_x, k_dir, k_x2, k_dir2 = jax.random.split(key, 4)

    # --- small primary case, consistent with the module ---
    n_centroids = 4       # C
    input_features = 32   # F
    batch = 8             # B

    # DistanceModule.__init__ / reset_parameters: offset = -1 (offset**2 == 1),
    # direction is a random +/-1 sign (non-trainable).
    offsets = -jnp.ones((n_centroids,), dtype=jnp.float32)
    directions = jnp.where(
        jax.random.uniform(k_dir, (n_centroids,)) >= 0.5, 1.0, -1.0
    ).astype(jnp.float32)
    x = jax.random.normal(k_x, (batch, input_features), dtype=jnp.float32)

    out = jax.block_until_ready(rbfnet_forward(x, offsets, directions))
    ref = rbfnet_reference(x, offsets, directions)
    assert out.shape == (batch, 1)
    assert jnp.allclose(out, ref, atol=1e-5, rtol=1e-5), (out, ref)

    # --- secondary case: exercises multi-tile grid + ragged-batch padding ---
    batch2 = 20           # not a multiple of the forced tile (8) -> padded tail
    directions2 = jnp.where(
        jax.random.uniform(k_dir2, (n_centroids,)) >= 0.5, 1.0, -1.0
    ).astype(jnp.float32)
    x2 = jax.random.normal(k_x2, (batch2, input_features), dtype=jnp.float32)

    out2 = jax.block_until_ready(
        rbfnet_forward(x2, offsets, directions2, max_tile=8)
    )
    ref2 = rbfnet_reference(x2, offsets, directions2)
    assert out2.shape == (batch2, 1)
    assert jnp.allclose(out2, ref2, atol=1e-5, rtol=1e-5), (out2, ref2)

    # TODO(synk): DistanceModule also stashes self.gdt = x / nrm for its
    # apply_jacobian; RBFnet.forward never uses it, so it is not materialized.
    print("KERNEL_OK")
</pallas_src>

<mosaic_0001>
module attributes {stable_mosaic.version = 11 : i64} {
  func.func @rbfnet_kernel(%arg0: i32, %arg1: memref<8x32xf32, #tpu.memory_space<vmem>>, %arg2: memref<1x4xf32, #tpu.memory_space<vmem>>, %arg3: memref<1x4xf32, #tpu.memory_space<vmem>>, %arg4: memref<8x1xf32, #tpu.memory_space<vmem>>) attributes {dimension_semantics = [#tpu.dimension_semantics<parallel>], iteration_bounds = array<i64: 1>, scalar_prefetch = 0 : i64, scratch_operands = 0 : i64, tpu.core_type = #tpu.core_type<tc>, window_params = [{transform_indices = @transform_0, window_bounds = array<i64: 8, 32>}, {pipeline_mode = #tpu.pipeline_mode<synchronous>, transform_indices = @transform_1, window_bounds = array<i64: 1, 4>}, {pipeline_mode = #tpu.pipeline_mode<synchronous>, transform_indices = @transform_2, window_bounds = array<i64: 1, 4>}, {transform_indices = @transform_3, window_bounds = array<i64: 8, 1>}]} {
    %c0 = arith.constant 0 : index
    %c0_0 = arith.constant 0 : index
    %0 = vector.load %arg1[%c0, %c0_0] : memref<8x32xf32, #tpu.memory_space<vmem>>, vector<8x32xf32>
    %1 = arith.mulf %0, %0 : vector<8x32xf32>
    %cst = arith.constant dense<0.000000e+00> : vector<8xf32>
    %2 = vector.multi_reduction <add>, %1, %cst [1] : vector<8x32xf32> to vector<8xf32>
    %3 = vector.shape_cast %2 : vector<8xf32> to vector<8x1xf32>
    %4 = math.sqrt %3 : vector<8x1xf32>
    %c0_1 = arith.constant 0 : index
    %c0_2 = arith.constant 0 : index
    %5 = vector.load %arg2[%c0_1, %c0_2] : memref<1x4xf32, #tpu.memory_space<vmem>>, vector<1x4xf32>
    %6 = vector.broadcast %5 : vector<1x4xf32> to vector<8x4xf32>
    %7 = vector.broadcast %4 : vector<8x1xf32> to vector<8x4xf32>
    %8 = arith.mulf %6, %7 : vector<8x4xf32>
    %c0_3 = arith.constant 0 : index
    %c0_4 = arith.constant 0 : index
    %9 = vector.load %arg3[%c0_3, %c0_4] : memref<1x4xf32, #tpu.memory_space<vmem>>, vector<1x4xf32>
    %10 = vector.broadcast %9 : vector<1x4xf32> to vector<8x4xf32>
    %11 = arith.addf %8, %10 : vector<8x4xf32>
    %cst_5 = arith.constant dense<0x7F800000> : vector<8xf32>
    %12 = vector.multi_reduction <minimumf>, %11, %cst_5 [1] : vector<8x4xf32> to vector<8xf32>
    %13 = vector.shape_cast %12 : vector<8xf32> to vector<8x1xf32>
    %c0_6 = arith.constant 0 : index
    %c0_7 = arith.constant 0 : index
    %14 = vector.load %arg4[%c0_6, %c0_7] : memref<8x1xf32, #tpu.memory_space<vmem>>, vector<8x1xf32>
    tpu.vector_store %arg4[%c0_6, %c0_7], %13 {strides = array<i32>} : memref<8x1xf32, #tpu.memory_space<vmem>>, vector<8x1xf32>,
    return
  }
  func.func @transform_0(%arg0: i32) -> (i32, i32) {
    %c0_i32 = arith.constant 0 : i32
    %c0_i32_0 = arith.constant 0 : i32
    return %arg0, %c0_i32 : i32, i32
  }
  func.func @transform_1(%arg0: i32) -> (i32, i32) {
    %c0_i32 = arith.constant 0 : i32
    %c0_i32_0 = arith.constant 0 : i32
    %c0_i32_1 = arith.constant 0 : i32
    return %c0_i32, %c0_i32_0 : i32, i32
  }
  func.func @transform_2(%arg0: i32) -> (i32, i32) {
    %c0_i32 = arith.constant 0 : i32
    %c0_i32_0 = arith.constant 0 : i32
    %c0_i32_1 = arith.constant 0 : i32
    return %c0_i32, %c0_i32_0 : i32, i32
  }
  func.func @transform_3(%arg0: i32) -> (i32, i32) {
    %c0_i32 = arith.constant 0 : i32
    %c0_i32_0 = arith.constant 0 : i32
    return %arg0, %c0_i32 : i32, i32
  }
}

</mosaic_0001>

<llo_original>
// kernel: tpu_custom_call.1
$region0: #{tpu_custom_call.1}
  #allocation0 [shape = 'u32[]', space=smem, size = 0x4, offset = 0x4, fixed_abs, tag = 'smem constant byte address 0x4 - core index']
  #allocation1 [shape = 'u32[144,128]{1,0:T(1,128)}', space=vmem, size = 0x12000, scoped, tag = 'internal scratch']
  %s0 = inlined_call_operand.hbm [shape: f32[8,32], index: 0, kind: input, shape index: {}]
  %s1 = inlined_call_operand.vmem [shape: f32[1,4], index: 1, kind: input, shape index: {}]
  %s2 = inlined_call_operand.vmem [shape: f32[1,4], index: 2, kind: input, shape index: {}]
  %s3 = inlined_call_operand.vmem [shape: f32[8,1], index: 3, kind: output, shape index: {}]
  %s4 = sld [smem:[#allocation0]]
  $region26: #{tpu_custom_call.1} parent=0
    _
  %s6 = ssub.s32 1, %s4
  %s7 = scalar_select 0, %s6, %s4
  $region1: #{tpu_custom_call.1} parent=0
    #allocation2 [shape = 'u8[4096]{0}', space=vmem, size = 0x1000, scoped, tag = 'input window, operand 0, single buffered']
    #allocation3 [shape = 's32[1]{0}', space=sflag, size = 0x4, scoped, tag = 'scoped memory for tpu_custom_call.1']
    %8 = vsyncpa [#allocation3], 0
    // Predicated region
    $region2: #{tpu_custom_call.1} parent=1 // pred_check
      _
    $region3: #{tpu_custom_call.1} parent=1 // pred_check_branch
      %10 = sbr.rel (0) target = $region5
    $region4: #{tpu_custom_call.1} parent=1 // pred_region
      %s12 = ssub.s32 128, 128
      %13 = vsyncadd [#allocation3], %s12
      %s15 = sshll.u32 [#allocation2], 4
      %s16 = int_to_ptr.vmem [resolvable:$true] %s15
      %18 = dma.hbm_to_vmem [thread:$0]  %s0, 128, %s16, [#allocation3]
    $region5: #{tpu_custom_call.1} parent=1 // pred_fallthru
      _
    // Predicated region
    $region6: #{tpu_custom_call.1} parent=1 // pred_check
      _
    $region7: #{tpu_custom_call.1} parent=1 // pred_check_branch
      %20 = sbr.rel (0) target = $region9
    $region8: #{tpu_custom_call.1} parent=1 // pred_region
      _
    $region9: #{tpu_custom_call.1} parent=1 // pred_fallthru
      _
    // Predicated region
    $region10: #{tpu_custom_call.1} parent=1 // pred_check
      _
    $region11: #{tpu_custom_call.1} parent=1 // pred_check_branch
      %22 = sbr.rel (0) target = $region13
    $region12: #{tpu_custom_call.1} parent=1 // pred_region
      _
    $region13: #{tpu_custom_call.1} parent=1 // pred_fallthru
      _
    // Predicated region
    $region14: #{tpu_custom_call.1} parent=1 // pred_check
      _
    $region15: #{tpu_custom_call.1} parent=1 // pred_check_branch
      %24 = sbr.rel (0) target = $region17
    $region16: #{tpu_custom_call.1} parent=1 // pred_region
      %25 = dma.done [#allocation3], 128
    $region17: #{tpu_custom_call.1} parent=1 // pred_fallthru
      _
    %v26 = vld [vmem:[#allocation2] sm:$0xff]
    %v27 = vmul.f32 %v26, %v26
    %vm28 = vcmask 261120
    %v29 = vsel %vm28, %v27, 0.0
    %30 = vadd.xlane.f32.xlu0 %v29
    %v31 = vpop.xlane.xlu0 %30
    %v32 = vrsqrt.pop %v31
    %v33 = vmul.f32 %v31, %v32
    %vm34 = vcmp.eq.f32.partialorder %v31, inf
    %v35 = vsel %vm34, %v31, %v33
    %vm36 = vcmp.eq.f32.partialorder %v31, 0.0
    %v37 = vand.u32 %v31, 2147483648
    %v38 = vsel %vm36, %v37, %v35
    %v39 = vld [vmem:[%s1] sm:$0x1]
    %v41 = vlaneseq
    %v42 = vshrl.u32 %v41, 7
    %v43 = vsub.s32 0, %v42
    %v44 = vrot.slane %v39, %v43
    %v46 = vmul.f32 %v44, %v38
    %v47 = vld [vmem:[%s2] sm:$0x1]
    %v49 = vlaneseq
    %v50 = vshrl.u32 %v49, 7
    %v51 = vsub.s32 0, %v50
    %v52 = vrot.slane %v47, %v51
    %v54 = vadd.f32 %v46, %v52
    %vm55 = vcmask 31744
    %v56 = vsel %vm55, %v54, inf
    %57 = vmin.xlane.f32.xlu0 %v56
    %v58 = vpop.xlane.xlu0 %57
    %vm59 = vcmask 7168
    %60 = vst.msk [vmem:[%s3] sm:$0xff] %vm59, %v58
    // Predicated region
    $region18: #{tpu_custom_call.1} parent=1 // pred_check
      _
    $region19: #{tpu_custom_call.1} parent=1 // pred_check_branch
      %62 = sbr.rel (0) target = $region21
    $region20: #{tpu_custom_call.1} parent=1 // pred_region
      _
    $region21: #{tpu_custom_call.1} parent=1 // pred_fallthru
      _
    // Predicated region
    $region22: #{tpu_custom_call.1} parent=1 // pred_check
      _
    $region23: #{tpu_custom_call.1} parent=1 // pred_check_branch
      %64 = sbr.rel (0) target = $region25
    $region24: #{tpu_custom_call.1} parent=1 // pred_region
      _
    $region25: #{tpu_custom_call.1} parent=1 // pred_fallthru
      _
    %65 = vsyncpa [#allocation3], 1

</llo_original>
